<compile_context>
chip_gen: v6e
topology: v6e:2x2x1
jax: 0.10.0
libtpu: 0.0.40
codegen_flags: <defaults>
</compile_context>

<pallas_src>
import numpy as np
import jax
import jax.numpy as jnp
from jax.experimental import pallas as pl
from jax.experimental.pallas import tpu as pltpu


def _make_fused_kernel(H, W):
    HW = H * W

    def kernel(x_ref, wd_ref, mask_ref, scale_ref, shift_ref, ws_ref, bs_ref,
               out_ref):
        # x_ref:     (1, C, HW)  one batch element, spatially flattened
        # wd_ref:    (C, 9)      depthwise 3x3 taps, channel-major
        # mask_ref:  (9, HW)     per-tap zero-padding boundary masks
        # scale_ref: (C, 1)      folded BN scale
        # shift_ref: (C, 1)      folded BN shift (depthwise bias included)
        # ws_ref:    (O, C)      1x1 conv weight
        # bs_ref:    (O, 1)      1x1 conv bias
        # out_ref:   (1, O, HW)
        C = x_ref.shape[1]
        O = out_ref.shape[1]

        x = x_ref[0].astype(jnp.float32)                  # (C, HW), one HBM read

        # Depthwise 3x3 conv with implicit zero padding: each tap is a lane
        # rotation (XLU slot, leaves VALU/vld free); boundary wraparound is
        # removed by the precomputed mask.
        acc = jnp.zeros((C, HW), jnp.float32)
        for dh in (-1, 0, 1):
            for dw in (-1, 0, 1):
                tap = (dh + 1) * 3 + (dw + 1)
                off = dh * W + dw
                shifted = x if off == 0 else pltpu.roll(x, (-off) % HW, axis=1)
                w_tap = wd_ref[:, tap:tap + 1]            # (C, 1)
                m_tap = mask_ref[tap:tap + 1, :]          # (1, HW)
                acc = acc + shifted * (w_tap * m_tap)

        # Folded BatchNorm (eval) + ReLU6
        act = acc * scale_ref[...] + shift_ref[...]
        act = jnp.clip(act, 0.0, 6.0)

        # Pointwise 1x1 conv
        if C <= 16:
            # Contraction too small to feed the MXU -> VPU multiply-accumulate.
            out = jnp.zeros((O, HW), jnp.float32)
            for c in range(C):
                out = out + ws_ref[:, c:c + 1] * act[c:c + 1, :]
        else:
            # TODO(synk): cast operands to bf16 for the MXU on v6e/v7x.
            out = jnp.dot(ws_ref[...], act, preferred_element_type=jnp.float32)

        out_ref[0] = (out + bs_ref[...]).astype(out_ref.dtype)

    return kernel


def deepse_conv(x, wd, bd, gamma, beta, rmean, rvar, ws, bs, eps=1e-5):
    N, C, H, W = x.shape
    O = ws.shape[0]
    HW = H * W

    # ---- parameter folding / dense packing (plain JAX, tiny) ----
    scale_vec = gamma / jnp.sqrt(rvar + eps)                  # (C,)
    shift_vec = (bd - rmean) * scale_vec + beta               # depthwise bias folded
    scale = scale_vec.reshape(C, 1).astype(jnp.float32)
    shift = shift_vec.reshape(C, 1).astype(jnp.float32)
    wd2 = wd.reshape(C, 9).astype(jnp.float32)                # (C, taps)
    ws2 = ws.reshape(O, C).astype(jnp.float32)
    bs2 = bs.reshape(O, 1).astype(jnp.float32)

    # Per-tap boundary masks for the implicit padding=1 (static in H, W).
    mask_np = np.zeros((9, H, W), np.float32)
    for dh in (-1, 0, 1):
        for dw in (-1, 0, 1):
            tap = (dh + 1) * 3 + (dw + 1)
            mask_np[tap,
                    max(0, -dh):min(H, H - dh),
                    max(0, -dw):min(W, W - dw)] = 1.0
    masks = jnp.asarray(mask_np.reshape(9, HW))

    x2 = x.reshape(N, C, HW)                                  # metadata-only reshape

    kernel = _make_fused_kernel(H, W)
    out = pl.pallas_call(
        kernel,
        out_shape=jax.ShapeDtypeStruct((N, O, HW), x.dtype),
        grid_spec=pltpu.PrefetchScalarGridSpec(
            num_scalar_prefetch=0,
            grid=(N,),
            in_specs=[
                pl.BlockSpec((1, C, HW), lambda n: (n, 0, 0)),   # x
                pl.BlockSpec((C, 9), lambda n: (0, 0)),          # dw weights
                pl.BlockSpec((9, HW), lambda n: (0, 0)),         # boundary masks
                pl.BlockSpec((C, 1), lambda n: (0, 0)),          # BN scale
                pl.BlockSpec((C, 1), lambda n: (0, 0)),          # BN shift
                pl.BlockSpec((O, C), lambda n: (0, 0)),          # 1x1 weight
                pl.BlockSpec((O, 1), lambda n: (0, 0)),          # 1x1 bias
            ],
            out_specs=pl.BlockSpec((1, O, HW), lambda n: (n, 0, 0)),
        ),
        compiler_params=pltpu.CompilerParams(
            dimension_semantics=("parallel",)),
    )(x2, wd2, masks, scale, shift, ws2, bs2)

    return out.reshape(N, O, H, W)


def reference(x, wd, bd, gamma, beta, rmean, rvar, ws, bs, eps=1e-5):
    # Pure-JAX reference of the same forward pass (eval-mode BN).
    N, C, H, W = x.shape
    O = ws.shape[0]
    dw = jax.lax.conv_general_dilated(
        x, wd, window_strides=(1, 1), padding=((1, 1), (1, 1)),
        dimension_numbers=("NCHW", "OIHW", "NCHW"), feature_group_count=C)
    dw = dw + bd.reshape(1, C, 1, 1)
    bn = (dw - rmean.reshape(1, C, 1, 1)) / jnp.sqrt(rvar.reshape(1, C, 1, 1) + eps)
    bn = bn * gamma.reshape(1, C, 1, 1) + beta.reshape(1, C, 1, 1)
    act = jnp.clip(bn, 0.0, 6.0)
    out = jnp.einsum("nchw,oc->nohw", act, ws.reshape(O, C)) + bs.reshape(1, O, 1, 1)
    return out


if __name__ == "__main__":
    N, Cin, Cout, H, W = 2, 4, 8, 16, 16

    key = jax.random.PRNGKey(0)
    ks = jax.random.split(key, 9)
    x = jax.random.normal(ks[0], (N, Cin, H, W), jnp.float32)
    wd = jax.random.normal(ks[1], (Cin, 1, 3, 3), jnp.float32) * 0.3   # d_conv.weight
    bd = jax.random.normal(ks[2], (Cin,), jnp.float32) * 0.1           # d_conv.bias
    gamma = 1.0 + 0.1 * jax.random.normal(ks[3], (Cin,), jnp.float32)  # bn.weight
    beta = 0.1 * jax.random.normal(ks[4], (Cin,), jnp.float32)         # bn.bias
    rmean = 0.1 * jax.random.normal(ks[5], (Cin,), jnp.float32)        # bn.running_mean
    rvar = jax.random.uniform(ks[6], (Cin,), jnp.float32, 0.5, 1.5)    # bn.running_var
    ws = jax.random.normal(ks[7], (Cout, Cin, 1, 1), jnp.float32) * 0.3  # s_conv.weight
    bs = jax.random.normal(ks[8], (Cout,), jnp.float32) * 0.1            # s_conv.bias

    out = deepse_conv(x, wd, bd, gamma, beta, rmean, rvar, ws, bs)
    out = jax.block_until_ready(out)

    ref = reference(x, wd, bd, gamma, beta, rmean, rvar, ws, bs)
    assert out.shape == (N, Cout, H, W)
    assert jnp.allclose(out, ref, atol=2e-4, rtol=2e-4), "mismatch vs reference"

    print("KERNEL_OK")
</pallas_src>

<mosaic_0001>
module attributes {stable_mosaic.version = 11 : i64} {
  func.func @kernel(%arg0: i32, %arg1: memref<1x4x256xf32, #tpu.memory_space<vmem>>, %arg2: memref<4x9xf32, #tpu.memory_space<vmem>>, %arg3: memref<9x256xf32, #tpu.memory_space<vmem>>, %arg4: memref<4x1xf32, #tpu.memory_space<vmem>>, %arg5: memref<4x1xf32, #tpu.memory_space<vmem>>, %arg6: memref<8x4xf32, #tpu.memory_space<vmem>>, %arg7: memref<8x1xf32, #tpu.memory_space<vmem>>, %arg8: memref<1x8x256xf32, #tpu.memory_space<vmem>>) attributes {dimension_semantics = [#tpu.dimension_semantics<parallel>], iteration_bounds = array<i64: 2>, scalar_prefetch = 0 : i64, scratch_operands = 0 : i64, tpu.core_type = #tpu.core_type<tc>, window_params = [{transform_indices = @transform_0, window_bounds = array<i64: 1, 4, 256>}, {pipeline_mode = #tpu.pipeline_mode<synchronous>, transform_indices = @transform_1, window_bounds = array<i64: 4, 9>}, {pipeline_mode = #tpu.pipeline_mode<synchronous>, transform_indices = @transform_2, window_bounds = array<i64: 9, 256>}, {pipeline_mode = #tpu.pipeline_mode<synchronous>, transform_indices = @transform_3, window_bounds = array<i64: 4, 1>}, {pipeline_mode = #tpu.pipeline_mode<synchronous>, transform_indices = @transform_4, window_bounds = array<i64: 4, 1>}, {pipeline_mode = #tpu.pipeline_mode<synchronous>, transform_indices = @transform_5, window_bounds = array<i64: 8, 4>}, {pipeline_mode = #tpu.pipeline_mode<synchronous>, transform_indices = @transform_6, window_bounds = array<i64: 8, 1>}, {transform_indices = @transform_7, window_bounds = array<i64: 1, 8, 256>}]} {
    %c0 = arith.constant 0 : index
    %c0_0 = arith.constant 0 : index
    %c0_1 = arith.constant 0 : index
    %0 = vector.load %arg1[%c0, %c0_0, %c0_1] : memref<1x4x256xf32, #tpu.memory_space<vmem>>, vector<1x4x256xf32>
    %1 = vector.shape_cast %0 : vector<1x4x256xf32> to vector<4x256xf32>
    %cst = arith.constant 0.000000e+00 : f32
    %2 = vector.broadcast %cst : f32 to vector<4x256xf32>
    %c17_i32 = arith.constant 17 : i32
    %3 = tpu.dynamic_rotate %1 by %c17_i32 dim 1 : vector<4x256xf32>, i32 -> vector<4x256xf32>
    %c0_2 = arith.constant 0 : index
    %c0_3 = arith.constant 0 : index
    %4 = vector.load %arg2[%c0_2, %c0_3] : memref<4x9xf32, #tpu.memory_space<vmem>>, vector<4x1xf32>
    %c0_4 = arith.constant 0 : index
    %c0_5 = arith.constant 0 : index
    %5 = vector.load %arg3[%c0_4, %c0_5] : memref<9x256xf32, #tpu.memory_space<vmem>>, vector<1x256xf32>
    %6 = vector.broadcast %4 : vector<4x1xf32> to vector<4x256xf32>
    %7 = vector.broadcast %5 : vector<1x256xf32> to vector<4x256xf32>
    %8 = arith.mulf %6, %7 : vector<4x256xf32>
    %9 = arith.mulf %3, %8 : vector<4x256xf32>
    %10 = arith.addf %2, %9 : vector<4x256xf32>
    %c16_i32 = arith.constant 16 : i32
    %11 = tpu.dynamic_rotate %1 by %c16_i32 dim 1 : vector<4x256xf32>, i32 -> vector<4x256xf32>
    %c0_6 = arith.constant 0 : index
    %c1 = arith.constant 1 : index
    %12 = vector.load %arg2[%c0_6, %c1] : memref<4x9xf32, #tpu.memory_space<vmem>>, vector<4x1xf32>
    %c1_7 = arith.constant 1 : index
    %c0_8 = arith.constant 0 : index
    %13 = vector.load %arg3[%c1_7, %c0_8] : memref<9x256xf32, #tpu.memory_space<vmem>>, vector<1x256xf32>
    %14 = vector.broadcast %12 : vector<4x1xf32> to vector<4x256xf32>
    %15 = vector.broadcast %13 : vector<1x256xf32> to vector<4x256xf32>
    %16 = arith.mulf %14, %15 : vector<4x256xf32>
    %17 = arith.mulf %11, %16 : vector<4x256xf32>
    %18 = arith.addf %10, %17 : vector<4x256xf32>
    %c15_i32 = arith.constant 15 : i32
    %19 = tpu.dynamic_rotate %1 by %c15_i32 dim 1 : vector<4x256xf32>, i32 -> vector<4x256xf32>
    %c0_9 = arith.constant 0 : index
    %c2 = arith.constant 2 : index
    %20 = vector.load %arg2[%c0_9, %c2] : memref<4x9xf32, #tpu.memory_space<vmem>>, vector<4x1xf32>
    %c2_10 = arith.constant 2 : index
    %c0_11 = arith.constant 0 : index
    %21 = vector.load %arg3[%c2_10, %c0_11] : memref<9x256xf32, #tpu.memory_space<vmem>>, vector<1x256xf32>
    %22 = vector.broadcast %20 : vector<4x1xf32> to vector<4x256xf32>
    %23 = vector.broadcast %21 : vector<1x256xf32> to vector<4x256xf32>
    %24 = arith.mulf %22, %23 : vector<4x256xf32>
    %25 = arith.mulf %19, %24 : vector<4x256xf32>
    %26 = arith.addf %18, %25 : vector<4x256xf32>
    %c1_i32 = arith.constant 1 : i32
    %27 = tpu.dynamic_rotate %1 by %c1_i32 dim 1 : vector<4x256xf32>, i32 -> vector<4x256xf32>
    %c0_12 = arith.constant 0 : index
    %c3 = arith.constant 3 : index
    %28 = vector.load %arg2[%c0_12, %c3] : memref<4x9xf32, #tpu.memory_space<vmem>>, vector<4x1xf32>
    %c3_13 = arith.constant 3 : index
    %c0_14 = arith.constant 0 : index
    %29 = vector.load %arg3[%c3_13, %c0_14] : memref<9x256xf32, #tpu.memory_space<vmem>>, vector<1x256xf32>
    %30 = vector.broadcast %28 : vector<4x1xf32> to vector<4x256xf32>
    %31 = vector.broadcast %29 : vector<1x256xf32> to vector<4x256xf32>
    %32 = arith.mulf %30, %31 : vector<4x256xf32>
    %33 = arith.mulf %27, %32 : vector<4x256xf32>
    %34 = arith.addf %26, %33 : vector<4x256xf32>
    %c0_15 = arith.constant 0 : index
    %c4 = arith.constant 4 : index
    %35 = vector.load %arg2[%c0_15, %c4] : memref<4x9xf32, #tpu.memory_space<vmem>>, vector<4x1xf32>
    %c4_16 = arith.constant 4 : index
    %c0_17 = arith.constant 0 : index
    %36 = vector.load %arg3[%c4_16, %c0_17] : memref<9x256xf32, #tpu.memory_space<vmem>>, vector<1x256xf32>
    %37 = vector.broadcast %35 : vector<4x1xf32> to vector<4x256xf32>
    %38 = vector.broadcast %36 : vector<1x256xf32> to vector<4x256xf32>
    %39 = arith.mulf %37, %38 : vector<4x256xf32>
    %40 = arith.mulf %1, %39 : vector<4x256xf32>
    %41 = arith.addf %34, %40 : vector<4x256xf32>
    %c255_i32 = arith.constant 255 : i32
    %42 = tpu.dynamic_rotate %1 by %c255_i32 dim 1 : vector<4x256xf32>, i32 -> vector<4x256xf32>
    %c0_18 = arith.constant 0 : index
    %c5 = arith.constant 5 : index
    %43 = vector.load %arg2[%c0_18, %c5] : memref<4x9xf32, #tpu.memory_space<vmem>>, vector<4x1xf32>
    %c5_19 = arith.constant 5 : index
    %c0_20 = arith.constant 0 : index
    %44 = vector.load %arg3[%c5_19, %c0_20] : memref<9x256xf32, #tpu.memory_space<vmem>>, vector<1x256xf32>
    %45 = vector.broadcast %43 : vector<4x1xf32> to vector<4x256xf32>
    %46 = vector.broadcast %44 : vector<1x256xf32> to vector<4x256xf32>
    %47 = arith.mulf %45, %46 : vector<4x256xf32>
    %48 = arith.mulf %42, %47 : vector<4x256xf32>
    %49 = arith.addf %41, %48 : vector<4x256xf32>
    %c241_i32 = arith.constant 241 : i32
    %50 = tpu.dynamic_rotate %1 by %c241_i32 dim 1 : vector<4x256xf32>, i32 -> vector<4x256xf32>
    %c0_21 = arith.constant 0 : index
    %c6 = arith.constant 6 : index
    %51 = vector.load %arg2[%c0_21, %c6] : memref<4x9xf32, #tpu.memory_space<vmem>>, vector<4x1xf32>
    %c6_22 = arith.constant 6 : index
    %c0_23 = arith.constant 0 : index
    %52 = vector.load %arg3[%c6_22, %c0_23] : memref<9x256xf32, #tpu.memory_space<vmem>>, vector<1x256xf32>
    %53 = vector.broadcast %51 : vector<4x1xf32> to vector<4x256xf32>
    %54 = vector.broadcast %52 : vector<1x256xf32> to vector<4x256xf32>
    %55 = arith.mulf %53, %54 : vector<4x256xf32>
    %56 = arith.mulf %50, %55 : vector<4x256xf32>
    %57 = arith.addf %49, %56 : vector<4x256xf32>
    %c240_i32 = arith.constant 240 : i32
    %58 = tpu.dynamic_rotate %1 by %c240_i32 dim 1 : vector<4x256xf32>, i32 -> vector<4x256xf32>
    %c0_24 = arith.constant 0 : index
    %c7 = arith.constant 7 : index
    %59 = vector.load %arg2[%c0_24, %c7] : memref<4x9xf32, #tpu.memory_space<vmem>>, vector<4x1xf32>
    %c7_25 = arith.constant 7 : index
    %c0_26 = arith.constant 0 : index
    %60 = vector.load %arg3[%c7_25, %c0_26] : memref<9x256xf32, #tpu.memory_space<vmem>>, vector<1x256xf32>
    %61 = vector.broadcast %59 : vector<4x1xf32> to vector<4x256xf32>
    %62 = vector.broadcast %60 : vector<1x256xf32> to vector<4x256xf32>
    %63 = arith.mulf %61, %62 : vector<4x256xf32>
    %64 = arith.mulf %58, %63 : vector<4x256xf32>
    %65 = arith.addf %57, %64 : vector<4x256xf32>
    %c239_i32 = arith.constant 239 : i32
    %66 = tpu.dynamic_rotate %1 by %c239_i32 dim 1 : vector<4x256xf32>, i32 -> vector<4x256xf32>
    %c0_27 = arith.constant 0 : index
    %c8 = arith.constant 8 : index
    %67 = vector.load %arg2[%c0_27, %c8] : memref<4x9xf32, #tpu.memory_space<vmem>>, vector<4x1xf32>
    %c8_28 = arith.constant 8 : index
    %c0_29 = arith.constant 0 : index
    %68 = vector.load %arg3[%c8_28, %c0_29] : memref<9x256xf32, #tpu.memory_space<vmem>>, vector<1x256xf32>
    %69 = vector.broadcast %67 : vector<4x1xf32> to vector<4x256xf32>
    %70 = vector.broadcast %68 : vector<1x256xf32> to vector<4x256xf32>
    %71 = arith.mulf %69, %70 : vector<4x256xf32>
    %72 = arith.mulf %66, %71 : vector<4x256xf32>
    %73 = arith.addf %65, %72 : vector<4x256xf32>
    %c0_30 = arith.constant 0 : index
    %c0_31 = arith.constant 0 : index
    %74 = vector.load %arg4[%c0_30, %c0_31] : memref<4x1xf32, #tpu.memory_space<vmem>>, vector<4x1xf32>
    %75 = vector.broadcast %74 : vector<4x1xf32> to vector<4x256xf32>
    %76 = arith.mulf %73, %75 : vector<4x256xf32>
    %c0_32 = arith.constant 0 : index
    %c0_33 = arith.constant 0 : index
    %77 = vector.load %arg5[%c0_32, %c0_33] : memref<4x1xf32, #tpu.memory_space<vmem>>, vector<4x1xf32>
    %78 = vector.broadcast %77 : vector<4x1xf32> to vector<4x256xf32>
    %79 = arith.addf %76, %78 : vector<4x256xf32>
    %cst_34 = arith.constant 0.000000e+00 : f32
    %cst_35 = arith.constant 6.000000e+00 : f32
    %80 = vector.broadcast %cst_34 : f32 to vector<4x256xf32>
    %81 = arith.maximumf %80, %79 : vector<4x256xf32>
    %82 = vector.broadcast %cst_35 : f32 to vector<4x256xf32>
    %83 = arith.minimumf %82, %81 : vector<4x256xf32>
    %cst_36 = arith.constant 0.000000e+00 : f32
    %84 = vector.broadcast %cst_36 : f32 to vector<8x256xf32>
    %c0_37 = arith.constant 0 : index
    %c0_38 = arith.constant 0 : index
    %85 = vector.load %arg6[%c0_37, %c0_38] : memref<8x4xf32, #tpu.memory_space<vmem>>, vector<8x1xf32>
    %86 = vector.extract_strided_slice %83 {offsets = [0, 0], sizes = [1, 256], strides = [1, 1]} : vector<4x256xf32> to vector<1x256xf32>
    %87 = vector.broadcast %85 : vector<8x1xf32> to vector<8x256xf32>
    %88 = vector.broadcast %86 : vector<1x256xf32> to vector<8x256xf32>
    %89 = arith.mulf %87, %88 : vector<8x256xf32>
    %90 = arith.addf %84, %89 : vector<8x256xf32>
    %c0_39 = arith.constant 0 : index
    %c1_40 = arith.constant 1 : index
    %91 = vector.load %arg6[%c0_39, %c1_40] : memref<8x4xf32, #tpu.memory_space<vmem>>, vector<8x1xf32>
    %92 = vector.extract_strided_slice %83 {offsets = [1, 0], sizes = [1, 256], strides = [1, 1]} : vector<4x256xf32> to vector<1x256xf32>
    %93 = vector.broadcast %91 : vector<8x1xf32> to vector<8x256xf32>
    %94 = vector.broadcast %92 : vector<1x256xf32> to vector<8x256xf32>
    %95 = arith.mulf %93, %94 : vector<8x256xf32>
    %96 = arith.addf %90, %95 : vector<8x256xf32>
    %c0_41 = arith.constant 0 : index
    %c2_42 = arith.constant 2 : index
    %97 = vector.load %arg6[%c0_41, %c2_42] : memref<8x4xf32, #tpu.memory_space<vmem>>, vector<8x1xf32>
    %98 = vector.extract_strided_slice %83 {offsets = [2, 0], sizes = [1, 256], strides = [1, 1]} : vector<4x256xf32> to vector<1x256xf32>
    %99 = vector.broadcast %97 : vector<8x1xf32> to vector<8x256xf32>
    %100 = vector.broadcast %98 : vector<1x256xf32> to vector<8x256xf32>
    %101 = arith.mulf %99, %100 : vector<8x256xf32>
    %102 = arith.addf %96, %101 : vector<8x256xf32>
    %c0_43 = arith.constant 0 : index
    %c3_44 = arith.constant 3 : index
    %103 = vector.load %arg6[%c0_43, %c3_44] : memref<8x4xf32, #tpu.memory_space<vmem>>, vector<8x1xf32>
    %104 = vector.extract_strided_slice %83 {offsets = [3, 0], sizes = [1, 256], strides = [1, 1]} : vector<4x256xf32> to vector<1x256xf32>
    %105 = vector.broadcast %103 : vector<8x1xf32> to vector<8x256xf32>
    %106 = vector.broadcast %104 : vector<1x256xf32> to vector<8x256xf32>
    %107 = arith.mulf %105, %106 : vector<8x256xf32>
    %108 = arith.addf %102, %107 : vector<8x256xf32>
    %c0_45 = arith.constant 0 : index
    %c0_46 = arith.constant 0 : index
    %109 = vector.load %arg7[%c0_45, %c0_46] : memref<8x1xf32, #tpu.memory_space<vmem>>, vector<8x1xf32>
    %110 = vector.broadcast %109 : vector<8x1xf32> to vector<8x256xf32>
    %111 = arith.addf %108, %110 : vector<8x256xf32>
    %c0_47 = arith.constant 0 : index
    %c0_48 = arith.constant 0 : index
    %c0_49 = arith.constant 0 : index
    %112 = vector.load %arg8[%c0_47, %c0_48, %c0_49] : memref<1x8x256xf32, #tpu.memory_space<vmem>>, vector<1x8x256xf32>
    %113 = vector.shape_cast %112 : vector<1x8x256xf32> to vector<8x256xf32>
    %114 = vector.shape_cast %111 : vector<8x256xf32> to vector<1x8x256xf32>
    tpu.vector_store %arg8[%c0_47, %c0_48, %c0_49], %114 {strides = array<i32>} : memref<1x8x256xf32, #tpu.memory_space<vmem>>, vector<1x8x256xf32>,
    return
  }
  func.func @transform_0(%arg0: i32) -> (i32, i32, i32) {
    %c0_i32 = arith.constant 0 : i32
    %c0_i32_0 = arith.constant 0 : i32
    %c0_i32_1 = arith.constant 0 : i32
    return %arg0, %c0_i32, %c0_i32_0 : i32, i32, i32
  }
  func.func @transform_1(%arg0: i32) -> (i32, i32) {
    %c0_i32 = arith.constant 0 : i32
    %c0_i32_0 = arith.constant 0 : i32
    %c0_i32_1 = arith.constant 0 : i32
    return %c0_i32, %c0_i32_0 : i32, i32
  }
  func.func @transform_2(%arg0: i32) -> (i32, i32) {
    %c0_i32 = arith.constant 0 : i32
    %c0_i32_0 = arith.constant 0 : i32
    %c0_i32_1 = arith.constant 0 : i32
    return %c0_i32, %c0_i32_0 : i32, i32
  }
  func.func @transform_3(%arg0: i32) -> (i32, i32) {
    %c0_i32 = arith.constant 0 : i32
    %c0_i32_0 = arith.constant 0 : i32
    %c0_i32_1 = arith.constant 0 : i32
    return %c0_i32, %c0_i32_0 : i32, i32
  }
  func.func @transform_4(%arg0: i32) -> (i32, i32) {
    %c0_i32 = arith.constant 0 : i32
    %c0_i32_0 = arith.constant 0 : i32
    %c0_i32_1 = arith.constant 0 : i32
    return %c0_i32, %c0_i32_0 : i32, i32
  }
  func.func @transform_5(%arg0: i32) -> (i32, i32) {
    %c0_i32 = arith.constant 0 : i32
    %c0_i32_0 = arith.constant 0 : i32
    %c0_i32_1 = arith.constant 0 : i32
    return %c0_i32, %c0_i32_0 : i32, i32
  }
  func.func @transform_6(%arg0: i32) -> (i32, i32) {
    %c0_i32 = arith.constant 0 : i32
    %c0_i32_0 = arith.constant 0 : i32
    %c0_i32_1 = arith.constant 0 : i32
    return %c0_i32, %c0_i32_0 : i32, i32
  }
  func.func @transform_7(%arg0: i32) -> (i32, i32, i32) {
    %c0_i32 = arith.constant 0 : i32
    %c0_i32_0 = arith.constant 0 : i32
    %c0_i32_1 = arith.constant 0 : i32
    return %arg0, %c0_i32, %c0_i32_0 : i32, i32, i32
  }
}

</mosaic_0001>

<llo_original>
// kernel: tpu_custom_call.1
$region0: #{tpu_custom_call.1}
  #allocation0 [shape = 'u32[]', space=smem, size = 0x4, offset = 0x4, fixed_abs, tag = 'smem constant byte address 0x4 - core index']
  #allocation1 [shape = 'u32[144,128]{1,0:T(1,128)}', space=vmem, size = 0x12000, scoped, tag = 'internal scratch']
  %s0 = inlined_call_operand.hbm [shape: f32[2,4,256], index: 0, kind: input, shape index: {}]
  %s1 = inlined_call_operand.hbm [shape: f32[4,9], index: 1, kind: input, shape index: {}]
  %s2 = inlined_call_operand.vmem [shape: f32[9,256], index: 2, kind: input, shape index: {}]
  %s3 = inlined_call_operand.vmem [shape: f32[4,1], index: 3, kind: input, shape index: {}]
  %s4 = inlined_call_operand.vmem [shape: f32[4,1], index: 4, kind: input, shape index: {}]
  %s5 = inlined_call_operand.vmem [shape: f32[8,4], index: 5, kind: input, shape index: {}]
  %s6 = inlined_call_operand.vmem [shape: f32[8,1], index: 6, kind: input, shape index: {}]
  %s7 = inlined_call_operand.hbm [shape: f32[2,8,256], index: 7, kind: output, shape index: {}]
  %s8 = sld [smem:[#allocation0]]
  $region69: #{tpu_custom_call.1} parent=0
    _
  %s10 = ssub.s32 1, %s8
  %s11 = scalar_select 0, %s10, %s8
  $region1: #{tpu_custom_call.1} parent=0
    #allocation2 [shape = 'u8[8192]{0}', space=vmem, size = 0x2000, scoped, tag = 'input window, operand 0']
    #allocation3 [shape = 's32[2]{0}', space=sflag, size = 0x8, scoped, tag = 'scoped memory for tpu_custom_call.1']
    #allocation4 [shape = 's32[2]{0}', space=sflag, size = 0x8, scoped, tag = 'scoped memory for tpu_custom_call.1']
    #allocation5 [shape = 'u8[2048]{0}', space=vmem, size = 0x800, scoped, tag = 'input window, operand 1, single buffered']
    #allocation6 [shape = 's32[1]{0}', space=sflag, size = 0x4, scoped, tag = 'scoped memory for tpu_custom_call.1']
    #allocation7 [shape = 'u8[16384]{0}', space=vmem, size = 0x4000, scoped, tag = 'output window, operand 0']
    %12 = vsyncpa [#allocation3], 0
    %s13 = scalar_lea.sflag [#allocation3], 1
    %14 = vsyncpa %s13, 0
    %15 = vsyncpa [#allocation6], 0
    %16 = vsyncpa [#allocation4], 0
    %s17 = scalar_lea.sflag [#allocation4], 1
    %18 = vsyncpa %s17, 0
    loop: start=0, step=1, limit=4
    $region2: #{tpu_custom_call.1} parent=1 // loop_pre_header
      _
    $region3: #{tpu_custom_call.1} parent=1 // loop_header
      %s20 = sphi 0, %s24
      %p21 = scmp.ge.s32.totalorder %s20, 4
      %s30 = sphi 0, %s32
      %s33 = sphi 0, %s30
      %s34 = sphi 0, %s33
      %s50 = sphi 0, %s34
      %s54 = sphi 0, %s54
      %s56 = sphi 0, %s54
      %s57 = sphi 0, %s56
      %s71 = sphi 0, %s57
      %s75 = sphi 0, %s75
      %s77 = sphi 0, %s75
      %s78 = sphi 0, %s77
      %s92 = sphi 0, %s78
      %s96 = sphi 0, %s96
      %s98 = sphi 0, %s96
      %s99 = sphi 0, %s98
      %s113 = sphi 0, %s99
      %s117 = sphi 0, %s117
      %s119 = sphi 0, %s117
      %s120 = sphi 0, %s119
      %s134 = sphi 0, %s120
      %s138 = sphi 0, %s138
      %s140 = sphi 0, %s138
      %s141 = sphi 0, %s140
      %s155 = sphi 0, %s141
      %s159 = sphi 0, %s159
      %s161 = sphi 0, %s159
      %s162 = sphi 0, %s161
      %s176 = sphi 0, %s162
      %s182 = sphi 0, %s184
      %s185 = sphi 0, %s182
      %s186 = sphi 0, %s185
      %s202 = sphi 0, %s186
    $region4: #{tpu_custom_call.1} parent=1 // loop_header_branch
      %23 = sbr.rel (%p21) target = $region8
    $region5: #{tpu_custom_call.1} parent=1 // loop_body
      %s25 = ssub.s32 %s20, 1
      %s26 = ssub.s32 %s20, 2
      %s27 = sadd.s32 %s20, 1
      %s28 = ssub.s32 %s20, %s27
      %p29 = scmp.eq.s32.totalorder %s28, 0
      %s31 = sadd.s32 %s30, 1
      %s32 = scalar_select %p29, %s30, %s31
      %p35 = pneg %p29
      %p36 = scmp.eq.s32.totalorder %s20, 1
      %p37 = por %p35, %p36
      %p38 = scmp.ne.s32.totalorder %s30, %s33
      %p39 = scmp.eq.s32.totalorder %s20, 0
      %p40 = por %p38, %p39
      %p41 = scmp.ne.s32.totalorder %s30, %s33
      %p42 = scmp.eq.s32.totalorder %s25, 1
      %p43 = por %p41, %p42
      %p44 = scmp.ne.s32.totalorder %s33, %s34
      %p45 = scmp.eq.s32.totalorder %s25, 0
      %p46 = por %p44, %p45
      %p47 = scmp.ne.s32.totalorder %s33, %s34
      %p48 = scmp.eq.s32.totalorder %s26, 1
      %p49 = por %p47, %p48
      %p51 = scmp.ne.s32.totalorder %s34, %s50
      %p52 = scmp.eq.s32.totalorder %s26, 0
      %p53 = por %p51, %p52
      %s55 = sadd.s32 %s54, 1
      %p58 = scmp.eq.s32.totalorder %s20, 1
      %p59 = scmp.ne.s32.totalorder %s54, %s56
      %p60 = scmp.eq.s32.totalorder %s20, 0
      %p61 = por %p59, %p60
      %p62 = scmp.ne.s32.totalorder %s54, %s56
      %p63 = scmp.eq.s32.totalorder %s25, 1
      %p64 = por %p62, %p63
      %p65 = scmp.ne.s32.totalorder %s56, %s57
      %p66 = scmp.eq.s32.totalorder %s25, 0
      %p67 = por %p65, %p66
      %p68 = scmp.ne.s32.totalorder %s56, %s57
      %p69 = scmp.eq.s32.totalorder %s26, 1
      %p70 = por %p68, %p69
      %p72 = scmp.ne.s32.totalorder %s57, %s71
      %p73 = scmp.eq.s32.totalorder %s26, 0
      %p74 = por %p72, %p73
      %s76 = sadd.s32 %s75, 1
      %p79 = scmp.eq.s32.totalorder %s20, 1
      %p80 = scmp.ne.s32.totalorder %s75, %s77
      %p81 = scmp.eq.s32.totalorder %s20, 0
      %p82 = por %p80, %p81
      %p83 = scmp.ne.s32.totalorder %s75, %s77
      %p84 = scmp.eq.s32.totalorder %s25, 1
      %p85 = por %p83, %p84
      %p86 = scmp.ne.s32.totalorder %s77, %s78
      %p87 = scmp.eq.s32.totalorder %s25, 0
      %p88 = por %p86, %p87
      %p89 = scmp.ne.s32.totalorder %s77, %s78
      %p90 = scmp.eq.s32.totalorder %s26, 1
      %p91 = por %p89, %p90
      %p93 = scmp.ne.s32.totalorder %s78, %s92
      %p94 = scmp.eq.s32.totalorder %s26, 0
      %p95 = por %p93, %p94
      %s97 = sadd.s32 %s96, 1
      %p100 = scmp.eq.s32.totalorder %s20, 1
      %p101 = scmp.ne.s32.totalorder %s96, %s98
      %p102 = scmp.eq.s32.totalorder %s20, 0
      %p103 = por %p101, %p102
      %p104 = scmp.ne.s32.totalorder %s96, %s98
      %p105 = scmp.eq.s32.totalorder %s25, 1
      %p106 = por %p104, %p105
      %p107 = scmp.ne.s32.totalorder %s98, %s99
      %p108 = scmp.eq.s32.totalorder %s25, 0
      %p109 = por %p107, %p108
      %p110 = scmp.ne.s32.totalorder %s98, %s99
      %p111 = scmp.eq.s32.totalorder %s26, 1
      %p112 = por %p110, %p111
      %p114 = scmp.ne.s32.totalorder %s99, %s113
      %p115 = scmp.eq.s32.totalorder %s26, 0
      %p116 = por %p114, %p115
      %s118 = sadd.s32 %s117, 1
      %p121 = scmp.eq.s32.totalorder %s20, 1
      %p122 = scmp.ne.s32.totalorder %s117, %s119
      %p123 = scmp.eq.s32.totalorder %s20, 0
      %p124 = por %p122, %p123
      %p125 = scmp.ne.s32.totalorder %s117, %s119
      %p126 = scmp.eq.s32.totalorder %s25, 1
      %p127 = por %p125, %p126
      %p128 = scmp.ne.s32.totalorder %s119, %s120
      %p129 = scmp.eq.s32.totalorder %s25, 0
      %p130 = por %p128, %p129
      %p131 = scmp.ne.s32.totalorder %s119, %s120
      %p132 = scmp.eq.s32.totalorder %s26, 1
      %p133 = por %p131, %p132
      %p135 = scmp.ne.s32.totalorder %s120, %s134
      %p136 = scmp.eq.s32.totalorder %s26, 0
      %p137 = por %p135, %p136
      %s139 = sadd.s32 %s138, 1
      %p142 = scmp.eq.s32.totalorder %s20, 1
      %p143 = scmp.ne.s32.totalorder %s138, %s140
      %p144 = scmp.eq.s32.totalorder %s20, 0
      %p145 = por %p143, %p144
      %p146 = scmp.ne.s32.totalorder %s138, %s140
      %p147 = scmp.eq.s32.totalorder %s25, 1
      %p148 = por %p146, %p147
      %p149 = scmp.ne.s32.totalorder %s140, %s141
      %p150 = scmp.eq.s32.totalorder %s25, 0
      %p151 = por %p149, %p150
      %p152 = scmp.ne.s32.totalorder %s140, %s141
      %p153 = scmp.eq.s32.totalorder %s26, 1
      %p154 = por %p152, %p153
      %p156 = scmp.ne.s32.totalorder %s141, %s155
      %p157 = scmp.eq.s32.totalorder %s26, 0
      %p158 = por %p156, %p157
      %s160 = sadd.s32 %s159, 1
      %p163 = scmp.eq.s32.totalorder %s20, 1
      %p164 = scmp.ne.s32.totalorder %s159, %s161
      %p165 = scmp.eq.s32.totalorder %s20, 0
      %p166 = por %p164, %p165
      %p167 = scmp.ne.s32.totalorder %s159, %s161
      %p168 = scmp.eq.s32.totalorder %s25, 1
      %p169 = por %p167, %p168
      %p170 = scmp.ne.s32.totalorder %s161, %s162
      %p171 = scmp.eq.s32.totalorder %s25, 0
      %p172 = por %p170, %p171
      %p173 = scmp.ne.s32.totalorder %s161, %s162
      %p174 = scmp.eq.s32.totalorder %s26, 1
      %p175 = por %p173, %p174
      %p177 = scmp.ne.s32.totalorder %s162, %s176
      %p178 = scmp.eq.s32.totalorder %s26, 0
      %p179 = por %p177, %p178
      %s180 = ssub.s32 %s20, %s27
      %p181 = scmp.eq.s32.totalorder %s180, 0
      %s183 = sadd.s32 %s182, 1
      %s184 = scalar_select %p181, %s182, %s183
      %p187 = pneg %p181
      %p188 = scmp.eq.s32.totalorder %s20, 1
      %p189 = por %p187, %p188
      %p190 = scmp.ne.s32.totalorder %s182, %s185
      %p191 = scmp.eq.s32.totalorder %s20, 0
      %p192 = por %p190, %p191
      %p193 = scmp.ne.s32.totalorder %s182, %s185
      %p194 = scmp.eq.s32.totalorder %s25, 1
      %p195 = por %p193, %p194
      %p196 = scmp.ne.s32.totalorder %s185, %s186
      %p197 = scmp.eq.s32.totalorder %s25, 0
      %p198 = por %p196, %p197
      %p199 = scmp.ne.s32.totalorder %s185, %s186
      %p200 = scmp.eq.s32.totalorder %s26, 1
      %p201 = por %p199, %p200
      %p203 = scmp.ne.s32.totalorder %s186, %s202
      %p204 = scmp.eq.s32.totalorder %s26, 0
      %p205 = por %p203, %p204
      %p206 = scmp.le.s32.totalorder 1, %s20
      %p207 = scmp.lt.s32.totalorder %s20, 3
      %p208 = pnand %p206, %p207
      %p209 = pneg %p208
      // Predicated region
      $region9: #{tpu_custom_call.1} parent=5 // pred_check
        _
      $region10: #{tpu_custom_call.1} parent=5 // pred_check_branch
        %211 = sbr.rel (%p208) target = $region12
      $region11: #{tpu_custom_call.1} parent=5 // pred_region
        %s212 = ssub.s32 %s20, 1
        // Predicated region
        $region13: #{tpu_custom_call.1} parent=11 // pred_check
          %p213 = pneg %p67
        $region14: #{tpu_custom_call.1} parent=11 // pred_check_branch
          %215 = sbr.rel (%p213) target = $region16
        $region15: #{tpu_custom_call.1} parent=11 // pred_region
          %s217 = ssub.s32 64, 64
          %218 = vsyncadd [#allocation6], %s217
          %s220 = sshll.u32 [#allocation5], 4
          %s221 = int_to_ptr.vmem [resolvable:$true] %s220
          %223 = dma.hbm_to_vmem [thread:$0]  %s1, 64, %s221, [#allocation6]
        $region16: #{tpu_custom_call.1} parent=11 // pred_fallthru
          _
        // Predicated region
        $region17: #{tpu_custom_call.1} parent=11 // pred_check
          %p224 = pneg %p88
        $region18: #{tpu_custom_call.1} parent=11 // pred_check_branch
          %226 = sbr.rel (%p224) target = $region20
        $region19: #{tpu_custom_call.1} parent=11 // pred_region
          _
        $region20: #{tpu_custom_call.1} parent=11 // pred_fallthru
          _
        // Predicated region
        $region21: #{tpu_custom_call.1} parent=11 // pred_check
          %p227 = pneg %p109
        $region22: #{tpu_custom_call.1} parent=11 // pred_check_branch
          %229 = sbr.rel (%p227) target = $region24
        $region23: #{tpu_custom_call.1} parent=11 // pred_region
          _
        $region24: #{tpu_custom_call.1} parent=11 // pred_fallthru
          _
        // Predicated region
        $region25: #{tpu_custom_call.1} parent=11 // pred_check
          %p230 = pneg %p130
        $region26: #{tpu_custom_call.1} parent=11 // pred_check_branch
          %232 = sbr.rel (%p230) target = $region28
        $region27: #{tpu_custom_call.1} parent=11 // pred_region
          _
        $region28: #{tpu_custom_call.1} parent=11 // pred_fallthru
          _
        // Predicated region
        $region29: #{tpu_custom_call.1} parent=11 // pred_check
          %p233 = pneg %p151
        $region30: #{tpu_custom_call.1} parent=11 // pred_check_branch
          %235 = sbr.rel (%p233) target = $region32
        $region31: #{tpu_custom_call.1} parent=11 // pred_region
          _
        $region32: #{tpu_custom_call.1} parent=11 // pred_fallthru
          _
        // Predicated region
        $region33: #{tpu_custom_call.1} parent=11 // pred_check
          %p236 = pneg %p172
        $region34: #{tpu_custom_call.1} parent=11 // pred_check_branch
          %238 = sbr.rel (%p236) target = $region36
        $region35: #{tpu_custom_call.1} parent=11 // pred_region
          _
        $region36: #{tpu_custom_call.1} parent=11 // pred_fallthru
          _
      $region12: #{tpu_custom_call.1} parent=5 // pred_fallthru
        _
      %p239 = scmp.lt.s32.totalorder %s20, 2
      // Predicated region
      $region37: #{tpu_custom_call.1} parent=5 // pred_check
        %p240 = pneg %p239
      $region38: #{tpu_custom_call.1} parent=5 // pred_check_branch
        %242 = sbr.rel (%p240) target = $region40
      $region39: #{tpu_custom_call.1} parent=5 // pred_region
        // Predicated region
        $region41: #{tpu_custom_call.1} parent=39 // pred_check
          %p243 = pneg %p40
        $region42: #{tpu_custom_call.1} parent=39 // pred_check_branch
          %245 = sbr.rel (%p243) target = $region44
        $region43: #{tpu_custom_call.1} parent=39 // pred_region
          %s246 = sand.u32 %s30, 1
          %s247 = scalar_lea.sflag [#allocation3], %s246
          %s248 = sand.u32 %s30, 1
          %s249 = smul.addr %s248, 8
          %s250 = scalar_lea.vmem [#allocation2], %s249
          %s252 = ssub.s32 128, 128
          %253 = vsyncadd %s247, %s252
          %s254 = smul.addr %s20, 2
          %s255 = smul.addr %s254, 64
          %s256 = scalar_lea.hbm %s0, %s255
          %s258 = sshll.u32 %s250, 4
          %s259 = int_to_ptr.vmem [resolvable:$true] %s258
          %261 = dma.hbm_to_vmem [thread:$0]  %s256, 128, %s259, %s247
        $region44: #{tpu_custom_call.1} parent=39 // pred_fallthru
          _
      $region40: #{tpu_custom_call.1} parent=5 // pred_fallthru
        _
      %p262 = scmp.le.s32.totalorder 1, %s20
      %p263 = scmp.lt.s32.totalorder %s20, 3
      %p264 = pnand %p262, %p263
      %p265 = pneg %p264
      // Predicated region
      $region45: #{tpu_custom_call.1} parent=5 // pred_check
        _
      $region46: #{tpu_custom_call.1} parent=5 // pred_check_branch
        %267 = sbr.rel (%p264) target = $region48
      $region47: #{tpu_custom_call.1} parent=5 // pred_region
        %s268 = ssub.s32 %s20, 1
        %s269 = sand.u32 %s33, 1
        %s270 = scalar_lea.sflag [#allocation3], %s269
        %s271 = sand.u32 %s33, 1
        %s272 = smul.addr %s271, 8
        %s273 = scalar_lea.vmem [#allocation2], %s272
        // Predicated region
        $region49: #{tpu_custom_call.1} parent=47 // pred_check
          %p274 = pneg %p46
        $region50: #{tpu_custom_call.1} parent=47 // pred_check_branch
          %276 = sbr.rel (%p274) target = $region52
        $region51: #{tpu_custom_call.1} parent=47 // pred_region
          %277 = dma.done %s270, 128
        $region52: #{tpu_custom_call.1} parent=47 // pred_fallthru
          _
        // Predicated region
        $region53: #{tpu_custom_call.1} parent=47 // pred_check
          %p278 = pneg %p67
        $region54: #{tpu_custom_call.1} parent=47 // pred_check_branch
          %280 = sbr.rel (%p278) target = $region56
        $region55: #{tpu_custom_call.1} parent=47 // pred_region
          %281 = dma.done [#allocation6], 64
        $region56: #{tpu_custom_call.1} parent=47 // pred_fallthru
          _
        %s282 = sand.u32 %s33, 1
        %s283 = scalar_lea.sflag [#allocation3], %s282
        %s284 = sand.u32 %s33, 1
        %s285 = smul.addr %s284, 8
        %s286 = scalar_lea.vmem [#allocation2], %s285
        %p287 = pneg %p46
        %p288 = pneg %p43
        %p289 = pneg %p67
        %p290 = pneg %p64
        %p291 = pneg %p88
        %p292 = pneg %p85
        %p293 = pneg %p109
        %p294 = pneg %p106
        %p295 = pneg %p130
        %p296 = pneg %p127
        %p297 = pneg %p151
        %p298 = pneg %p148
        %p299 = pneg %p172
        %p300 = pneg %p169
        %p301 = pneg %p198
        %p302 = pneg %p195
        %s303 = sand.u32 %s185, 1
        %s304 = scalar_lea.sflag [#allocation4], %s303
        %s305 = sand.u32 %s185, 1
        %s306 = smul.addr %s305, 16
        %s307 = scalar_lea.vmem [#allocation7], %s306
        %v308 = vld [vmem:[%s273] sm:$0xff]
        %v310 = vcombine.high %v308, %v308
        %312 = vrot.lane.b32.xlu0 %v308, 17
        %v313 = vpop.permute.xlu0 %312
        %314 = vrot.lane.b32.xlu0 %v310, 17
        %v315 = vpop.permute.xlu0 %314
        %v316 = vlaneseq
        %v317 = vand.u32 %v316, 127
        %vm318 = vcmp.lt.s32.totalorder %v317, 17
        %v319 = vsel %vm318, %v313, %v315
        %v320 = vsel %vm318, %v315, %v313
        %v321 = vld [vmem:[#allocation5] sm:$0xf]
        %v322 = vld [vmem:[%s2] ss:$8 sm:$0x3]
        %324 = vset.pattern.permute.xlu0 0
        %325 = vperm.xlu0 %324, %v321
        %v326 = vpop.permute.xlu0 %325
        %v329 = vlaneseq
        %v330 = vshrl.u32 %v329, 7
        %v331 = vsub.s32 0, %v330
        %v332 = vrot.slane %v322, %v331
        %v333 = vlaneseq
        %v334 = vshrl.u32 %v333, 7
        %v335 = vsub.s32 1, %v334
        %v336 = vrot.slane %v322, %v335
        %v339 = vmul.f32 %v326, %v332
        %v340 = vmul.f32 %v326, %v336
        %v341 = vmul.f32 %v320, %v339
        %v342 = vmul.f32 %v319, %v340
        %v343 = vadd.f32 %v341, 0.0
        %v344 = vadd.f32 %v342, 0.0
        %345 = vrot.lane.b32.xlu0 %v308, 16
        %v346 = vpop.permute.xlu0 %345
        %347 = vrot.lane.b32.xlu0 %v310, 16
        %v348 = vpop.permute.xlu0 %347
        %vm349 = vcmp.lt.s32.totalorder %v317, 16
        %v350 = vsel %vm349, %v346, %v348
        %v351 = vsel %vm349, %v348, %v346
        %v352 = vld [vmem:[#allocation5] sm:$0xf]
        %s353 = scalar_lea.vmem %s2, 1
        %v354 = vld [vmem:[%s353] ss:$8 sm:$0x3]
        %356 = vset.pattern.permute.xlu0 1
        %357 = vperm.xlu0 %356, %v352
        %v358 = vpop.permute.xlu0 %357
        %v361 = vlaneseq
        %v362 = vshrl.u32 %v361, 7
        %v363 = vsub.s32 0, %v362
        %v364 = vrot.slane %v354, %v363
        %v365 = vlaneseq
        %v366 = vshrl.u32 %v365, 7
        %v367 = vsub.s32 1, %v366
        %v368 = vrot.slane %v354, %v367
        %v371 = vmul.f32 %v358, %v364
        %v372 = vmul.f32 %v358, %v368
        %v373 = vmul.f32 %v351, %v371
        %v374 = vmul.f32 %v350, %v372
        %v375 = vadd.f32 %v343, %v373
        %v376 = vadd.f32 %v344, %v374
        %377 = vrot.lane.b32.xlu0 %v308, 15
        %v378 = vpop.permute.xlu0 %377
        %379 = vrot.lane.b32.xlu0 %v310, 15
        %v380 = vpop.permute.xlu0 %379
        %vm381 = vcmp.lt.s32.totalorder %v317, 15
        %v382 = vsel %vm381, %v378, %v380
        %v383 = vsel %vm381, %v380, %v378
        %v384 = vld [vmem:[#allocation5] sm:$0xf]
        %s385 = scalar_lea.vmem %s2, 2
        %v386 = vld [vmem:[%s385] ss:$8 sm:$0x3]
        %388 = vset.pattern.permute.xlu0 2
        %389 = vperm.xlu0 %388, %v384
        %v390 = vpop.permute.xlu0 %389
        %v393 = vlaneseq
        %v394 = vshrl.u32 %v393, 7
        %v395 = vsub.s32 0, %v394
        %v396 = vrot.slane %v386, %v395
        %v397 = vlaneseq
        %v398 = vshrl.u32 %v397, 7
        %v399 = vsub.s32 1, %v398
        %v400 = vrot.slane %v386, %v399
        %v403 = vmul.f32 %v390, %v396
        %v404 = vmul.f32 %v390, %v400
        %v405 = vmul.f32 %v383, %v403
        %v406 = vmul.f32 %v382, %v404
        %v407 = vadd.f32 %v375, %v405
        %v408 = vadd.f32 %v376, %v406
        %409 = vrot.lane.b32.xlu0 %v308, 1
        %v410 = vpop.permute.xlu0 %409
        %411 = vrot.lane.b32.xlu0 %v310, 1
        %v412 = vpop.permute.xlu0 %411
        %vm413 = vcmp.lt.s32.totalorder %v317, 1
        %v414 = vsel %vm413, %v410, %v412
        %v415 = vsel %vm413, %v412, %v410
        %v416 = vld [vmem:[#allocation5] sm:$0xf]
        %s417 = scalar_lea.vmem %s2, 3
        %v418 = vld [vmem:[%s417] ss:$8 sm:$0x3]
        %420 = vset.pattern.permute.xlu0 3
        %421 = vperm.xlu0 %420, %v416
        %v422 = vpop.permute.xlu0 %421
        %v425 = vlaneseq
        %v426 = vshrl.u32 %v425, 7
        %v427 = vsub.s32 0, %v426
        %v428 = vrot.slane %v418, %v427
        %v429 = vlaneseq
        %v430 = vshrl.u32 %v429, 7
        %v431 = vsub.s32 1, %v430
        %v432 = vrot.slane %v418, %v431
        %v435 = vmul.f32 %v422, %v428
        %v436 = vmul.f32 %v422, %v432
        %v437 = vmul.f32 %v415, %v435
        %v438 = vmul.f32 %v414, %v436
        %v439 = vadd.f32 %v407, %v437
        %v440 = vadd.f32 %v408, %v438
        %s441 = scalar_lea.vmem %s2, 4
        %v442 = vld [vmem:[%s441] ss:$8 sm:$0x3]
        %443 = vset.pattern.permute.xlu0 4
        %444 = vperm.xlu0 %443, %v416
        %v445 = vpop.permute.xlu0 %444
        %v448 = vlaneseq
        %v449 = vshrl.u32 %v448, 7
        %v450 = vsub.s32 0, %v449
        %v451 = vrot.slane %v442, %v450
        %v452 = vlaneseq
        %v453 = vshrl.u32 %v452, 7
        %v454 = vsub.s32 1, %v453
        %v455 = vrot.slane %v442, %v454
        %v458 = vmul.f32 %v445, %v451
        %v459 = vmul.f32 %v445, %v455
        %v462 = vcombine.low %v458, %v459
        %v464 = vmul.f32 %v308, %v462
        %v466 = vcombine.high %v464, %v464
        %v468 = vadd.f32 %v439, %v464
        %v469 = vadd.f32 %v440, %v466
        %470 = vrot.lane.b32.xlu0 %v308, 127
        %v471 = vpop.permute.xlu0 %470
        %472 = vrot.lane.b32.xlu0 %v310, 127
        %v473 = vpop.permute.xlu0 %472
        %vm474 = vcmp.lt.s32.totalorder %v317, 127
        %v475 = vsel %vm474, %v471, %v473
        %v476 = vsel %vm474, %v473, %v471
        %v477 = vld [vmem:[#allocation5] sm:$0xf]
        %s478 = scalar_lea.vmem %s2, 5
        %v479 = vld [vmem:[%s478] ss:$8 sm:$0x3]
        %481 = vset.pattern.permute.xlu0 5
        %482 = vperm.xlu0 %481, %v477
        %v483 = vpop.permute.xlu0 %482
        %v486 = vlaneseq
        %v487 = vshrl.u32 %v486, 7
        %v488 = vsub.s32 0, %v487
        %v489 = vrot.slane %v479, %v488
        %v490 = vlaneseq
        %v491 = vshrl.u32 %v490, 7
        %v492 = vsub.s32 1, %v491
        %v493 = vrot.slane %v479, %v492
        %v496 = vmul.f32 %v483, %v489
        %v497 = vmul.f32 %v483, %v493
        %v498 = vmul.f32 %v475, %v496
        %v499 = vmul.f32 %v476, %v497
        %v500 = vadd.f32 %v468, %v498
        %v501 = vadd.f32 %v469, %v499
        %502 = vrot.lane.b32.xlu0 %v308, 113
        %v503 = vpop.permute.xlu0 %502
        %504 = vrot.lane.b32.xlu0 %v310, 113
        %v505 = vpop.permute.xlu0 %504
        %vm506 = vcmp.lt.s32.totalorder %v317, 113
        %v507 = vsel %vm506, %v503, %v505
        %v508 = vsel %vm506, %v505, %v503
        %v509 = vld [vmem:[#allocation5] sm:$0xf]
        %s510 = scalar_lea.vmem %s2, 6
        %v511 = vld [vmem:[%s510] ss:$8 sm:$0x3]
        %513 = vset.pattern.permute.xlu0 6
        %514 = vperm.xlu0 %513, %v509
        %v515 = vpop.permute.xlu0 %514
        %v518 = vlaneseq
        %v519 = vshrl.u32 %v518, 7
        %v520 = vsub.s32 0, %v519
        %v521 = vrot.slane %v511, %v520
        %v522 = vlaneseq
        %v523 = vshrl.u32 %v522, 7
        %v524 = vsub.s32 1, %v523
        %v525 = vrot.slane %v511, %v524
        %v528 = vmul.f32 %v515, %v521
        %v529 = vmul.f32 %v515, %v525
        %v530 = vmul.f32 %v507, %v528
        %v531 = vmul.f32 %v508, %v529
        %v532 = vadd.f32 %v500, %v530
        %v533 = vadd.f32 %v501, %v531
        %534 = vrot.lane.b32.xlu0 %v308, 112
        %v535 = vpop.permute.xlu0 %534
        %536 = vrot.lane.b32.xlu0 %v310, 112
        %v537 = vpop.permute.xlu0 %536
        %vm538 = vcmp.lt.s32.totalorder %v317, 112
        %v539 = vsel %vm538, %v535, %v537
        %v540 = vsel %vm538, %v537, %v535
        %v541 = vld [vmem:[#allocation5] sm:$0xf]
        %s542 = scalar_lea.vmem %s2, 7
        %v543 = vld [vmem:[%s542] ss:$8 sm:$0x3]
        %545 = vset.pattern.permute.xlu0 7
        %546 = vperm.xlu0 %545, %v541
        %v547 = vpop.permute.xlu0 %546
        %v550 = vlaneseq
        %v551 = vshrl.u32 %v550, 7
        %v552 = vsub.s32 0, %v551
        %v553 = vrot.slane %v543, %v552
        %v554 = vlaneseq
        %v555 = vshrl.u32 %v554, 7
        %v556 = vsub.s32 1, %v555
        %v557 = vrot.slane %v543, %v556
        %v560 = vmul.f32 %v547, %v553
        %v561 = vmul.f32 %v547, %v557
        %v562 = vmul.f32 %v539, %v560
        %v563 = vmul.f32 %v540, %v561
        %v564 = vadd.f32 %v532, %v562
        %v565 = vadd.f32 %v533, %v563
        %566 = vrot.lane.b32.xlu0 %v308, 111
        %v567 = vpop.permute.xlu0 %566
        %568 = vrot.lane.b32.xlu0 %v310, 111
        %v569 = vpop.permute.xlu0 %568
        %vm570 = vcmp.lt.s32.totalorder %v317, 111
        %v571 = vsel %vm570, %v567, %v569
        %v572 = vsel %vm570, %v569, %v567
        %v573 = vld [vmem:[#allocation5] sm:$0xf]
        %s574 = scalar_lea.vmem %s2, 16
        %v575 = vld [vmem:[%s574] ss:$8 sm:$0x3]
        %577 = vset.pattern.permute.xlu0 8
        %578 = vperm.xlu0 %577, %v573
        %v579 = vpop.permute.xlu0 %578
        %v582 = vlaneseq
        %v583 = vshrl.u32 %v582, 7
        %v584 = vsub.s32 0, %v583
        %v585 = vrot.slane %v575, %v584
        %v586 = vlaneseq
        %v587 = vshrl.u32 %v586, 7
        %v588 = vsub.s32 1, %v587
        %v589 = vrot.slane %v575, %v588
        %v592 = vmul.f32 %v579, %v585
        %v593 = vmul.f32 %v579, %v589
        %v594 = vmul.f32 %v571, %v592
        %v595 = vmul.f32 %v572, %v593
        %v596 = vadd.f32 %v564, %v594
        %v597 = vadd.f32 %v565, %v595
        %v598 = vld [vmem:[%s3] sm:$0xf]
        %600 = vset.pattern.permute.xlu0 0
        %601 = vperm.xlu0 %600, %v598
        %v602 = vpop.permute.xlu0 %601
        %v604 = vmul.f32 %v596, %v602
        %v605 = vmul.f32 %v597, %v602
        %v606 = vld [vmem:[%s4] sm:$0xf]
        %608 = vset.pattern.permute.xlu0 0
        %609 = vperm.xlu0 %608, %v606
        %v610 = vpop.permute.xlu0 %609
        %v612 = vadd.f32 %v604, %v610
        %v613 = vadd.f32 %v605, %v610
        %v614 = vmax.f32 %v612, 0.0
        %v615 = vmax.f32 %v613, 0.0
        %v616 = vmin.f32 %v614, 6.0
        %v617 = vmin.f32 %v615, 6.0
        %v618 = vld [vmem:[%s5] sm:$0xff]
        %620 = vset.pattern.permute.xlu0 0
        %621 = vperm.xlu0 %620, %v618
        %v622 = vpop.permute.xlu0 %621
        %v624 = vlaneseq
        %v625 = vshrl.u32 %v624, 7
        %v626 = vsub.s32 0, %v625
        %v627 = vrot.slane %v616, %v626
        %v628 = vlaneseq
        %v629 = vshrl.u32 %v628, 7
        %v630 = vsub.s32 0, %v629
        %v631 = vrot.slane %v617, %v630
        %v632 = vmul.f32 %v622, %v627
        %v633 = vmul.f32 %v622, %v631
        %v634 = vadd.f32 %v632, 0.0
        %v635 = vadd.f32 %v633, 0.0
        %636 = vset.pattern.permute.xlu0 1
        %637 = vperm.xlu0 %636, %v618
        %v638 = vpop.permute.xlu0 %637
        %v640 = vlaneseq
        %v641 = vshrl.u32 %v640, 7
        %v642 = vsub.s32 1, %v641
        %v643 = vrot.slane %v616, %v642
        %v644 = vlaneseq
        %v645 = vshrl.u32 %v644, 7
        %v646 = vsub.s32 1, %v645
        %v647 = vrot.slane %v617, %v646
        %v648 = vmul.f32 %v638, %v643
        %v649 = vmul.f32 %v638, %v647
        %v650 = vadd.f32 %v634, %v648
        %v651 = vadd.f32 %v635, %v649
        %652 = vset.pattern.permute.xlu0 2
        %653 = vperm.xlu0 %652, %v618
        %v654 = vpop.permute.xlu0 %653
        %v656 = vlaneseq
        %v657 = vshrl.u32 %v656, 7
        %v658 = vsub.s32 2, %v657
        %v659 = vrot.slane %v616, %v658
        %v660 = vlaneseq
        %v661 = vshrl.u32 %v660, 7
        %v662 = vsub.s32 2, %v661
        %v663 = vrot.slane %v617, %v662
        %v664 = vmul.f32 %v654, %v659
        %v665 = vmul.f32 %v654, %v663
        %v666 = vadd.f32 %v650, %v664
        %v667 = vadd.f32 %v651, %v665
        %668 = vset.pattern.permute.xlu0 3
        %669 = vperm.xlu0 %668, %v618
        %v670 = vpop.permute.xlu0 %669
        %v672 = vlaneseq
        %v673 = vshrl.u32 %v672, 7
        %v674 = vsub.s32 3, %v673
        %v675 = vrot.slane %v616, %v674
        %v676 = vlaneseq
        %v677 = vshrl.u32 %v676, 7
        %v678 = vsub.s32 3, %v677
        %v679 = vrot.slane %v617, %v678
        %v680 = vmul.f32 %v670, %v675
        %v681 = vmul.f32 %v670, %v679
        %v682 = vadd.f32 %v666, %v680
        %v683 = vadd.f32 %v667, %v681
        %v684 = vld [vmem:[%s6] sm:$0xff]
        %686 = vset.pattern.permute.xlu0 0
        %687 = vperm.xlu0 %686, %v684
        %v688 = vpop.permute.xlu0 %687
        %v690 = vadd.f32 %v682, %v688
        %v691 = vadd.f32 %v683, %v688
        %692 = vst [vmem:[%s307] sm:$0xff] %v690
        %693 = vst [vmem:[%s307 + $0x8] sm:$0xff] %v691
        %s694 = sand.u32 %s185, 1
        %s695 = scalar_lea.sflag [#allocation4], %s694
        %s696 = sand.u32 %s185, 1
        %s697 = smul.addr %s696, 16
        %s698 = scalar_lea.vmem [#allocation7], %s697
        // Predicated region
        $region57: #{tpu_custom_call.1} parent=47 // pred_check
          %p699 = pneg %p195
        $region58: #{tpu_custom_call.1} parent=47 // pred_check_branch
          %701 = sbr.rel (%p699) target = $region60
        $region59: #{tpu_custom_call.1} parent=47 // pred_region
          %s703 = ssub.s32 256, 256
          %704 = vsyncadd %s695, %s703
          %s705 = smul.addr %s25, 2
          %s706 = smul.addr %s705, 128
          %s707 = scalar_lea.hbm %s7, %s706
          %s709 = sshll.u32 %s698, 4
          %s710 = int_to_ptr.vmem [resolvable:$true] %s709
          %712 = dma.vmem_to_hbm [thread:$0]  %s710, 256, %s707, %s695
        $region60: #{tpu_custom_call.1} parent=47 // pred_fallthru
          _
      $region48: #{tpu_custom_call.1} parent=5 // pred_fallthru
        _
      %p713 = scmp.le.s32.totalorder 2, %s20
      // Predicated region
      $region61: #{tpu_custom_call.1} parent=5 // pred_check
        %p714 = pneg %p713
      $region62: #{tpu_custom_call.1} parent=5 // pred_check_branch
        %716 = sbr.rel (%p714) target = $region64
      $region63: #{tpu_custom_call.1} parent=5 // pred_region
        %s717 = ssub.s32 %s20, 2
        // Predicated region
        $region65: #{tpu_custom_call.1} parent=63 // pred_check
          %p718 = pneg %p201
        $region66: #{tpu_custom_call.1} parent=63 // pred_check_branch
          %720 = sbr.rel (%p718) target = $region68
        $region67: #{tpu_custom_call.1} parent=63 // pred_region
          %s721 = sand.u32 %s186, 1
          %s722 = scalar_lea.sflag [#allocation4], %s721
          %s723 = sand.u32 %s186, 1
          %s724 = smul.addr %s723, 16
          %s725 = scalar_lea.vmem [#allocation7], %s724
          %726 = dma.done %s722, 256
        $region68: #{tpu_custom_call.1} parent=63 // pred_fallthru
          _
      $region64: #{tpu_custom_call.1} parent=5 // pred_fallthru
        _
    $region6: #{tpu_custom_call.1} parent=1 // loop_footer
      %s24 = sadd.s32 1, %s20
    $region7: #{tpu_custom_call.1} parent=1 // loop_footer_branch
      %19 = sbr.rel target = $region3
    $region8: #{tpu_custom_call.1} parent=1 // loop_exit
      _
    %727 = vsyncpa [#allocation3], 1
    %s728 = scalar_lea.sflag [#allocation3], 1
    %729 = vsyncpa %s728, 1
    %730 = vsyncpa [#allocation6], 1
    %731 = vsyncpa [#allocation4], 1
    %s732 = scalar_lea.sflag [#allocation4], 1
    %733 = vsyncpa %s732, 1

</llo_original>
